<compile_context>
chip_gen: v6e
topology: v6e:2x2x1
jax: 0.10.0
libtpu: 0.0.40
codegen_flags: <defaults>
</compile_context>

<pallas_src>
import jax
import jax.numpy as jnp
from jax.experimental import pallas as pl
from jax.experimental.pallas import tpu as pltpu

HID = 128    # hidden width of the first Linear
HX = 32      # self.hx_size


def _round_up(x, m):
    return (x + m - 1) // m * m


def _block_diag(ws):
    """Stacked per-agent weights (A, fin, fout) -> block-diagonal (A*fin, A*fout)."""
    a, fin, fout = ws.shape
    eye = jnp.eye(a, dtype=ws.dtype)
    return jnp.einsum("aij,ab->aibj", ws, eye).reshape(a * fin, a * fout)


def _qnet_kernel(obs_ref, w1_ref, b1_ref, w2_ref, b2_ref, wq_ref, bq_ref, q_ref):
    # obs_ref: (tB, A*n_obs) batch tile; weights are full block-diag, resident.
    x = obs_ref[...]
    h1 = jnp.dot(x, w1_ref[...], preferred_element_type=jnp.float32) + b1_ref[...]
    h1 = jnp.maximum(h1, 0.0).astype(w2_ref.dtype)          # (tB, A*128)
    h2 = jnp.dot(h1, w2_ref[...], preferred_element_type=jnp.float32) + b2_ref[...]
    h2 = jnp.maximum(h2, 0.0).astype(wq_ref.dtype)          # (tB, A*32)
    q = jnp.dot(h2, wq_ref[...], preferred_element_type=jnp.float32) + bq_ref[...]
    q_ref[...] = q.astype(q_ref.dtype)                      # (tB, A*n_act) compact store


def qnet_forward(obs, hidden, params, *, tile_b=1024, compute_dtype=jnp.float32):
    """obs: (B, A, n_obs), hidden: (B, A, HX) (unused, recurrent=False)."""
    del hidden  # non-recurrent path does not use it
    B, A, n_obs = obs.shape
    n_act = params["wq"].shape[-1]

    # ---- batch tiling: multiple of 8, aim for >=2 grid steps (v7x megacore),
    # pad only to num_tiles*tB (bounded waste, never ~2x).
    tile_b = max(8, _round_up(tile_b, 8))
    B_pad8 = _round_up(B, 8)
    tB = min(tile_b, max(8, _round_up(pl.cdiv(B_pad8, 2), 8)))
    num_tiles = pl.cdiv(B_pad8, tB)
    B_pad = num_tiles * tB

    # ---- free reshape (no transpose): (B, A, n_obs) -> (B, A*n_obs), zero-pad rows.
    obs_flat = obs.reshape(B, A * n_obs).astype(compute_dtype)
    if B_pad != B:
        obs_flat = jnp.pad(obs_flat, ((0, B_pad - B), (0, 0)))

    # ---- block-diagonal fused weights (built in the wrapper), f32 biases.
    w1_bd = _block_diag(params["w1"]).astype(compute_dtype)   # (A*n_obs, A*HID)
    w2_bd = _block_diag(params["w2"]).astype(compute_dtype)   # (A*HID,  A*HX)
    wq_bd = _block_diag(params["wq"]).astype(compute_dtype)   # (A*HX,   A*n_act)
    b1_cat = params["b1"].reshape(1, A * HID).astype(jnp.float32)
    b2_cat = params["b2"].reshape(1, A * HX).astype(jnp.float32)
    bq_cat = params["bq"].reshape(1, A * n_act).astype(jnp.float32)

    itemsize = jnp.dtype(compute_dtype).itemsize
    flops = 2 * B_pad * ((A * n_obs) * (A * HID) + (A * HID) * (A * HX)
                         + (A * HX) * (A * n_act))
    bytes_accessed = (B_pad * A * n_obs * itemsize                     # obs read
                      + (w1_bd.size + w2_bd.size + wq_bd.size) * itemsize
                      + (b1_cat.size + b2_cat.size + bq_cat.size) * 4  # biases
                      + B_pad * A * n_act * 4)                         # q write

    q_flat = pl.pallas_call(
        _qnet_kernel,
        out_shape=jax.ShapeDtypeStruct((B_pad, A * n_act), jnp.float32),
        grid=(num_tiles,),
        in_specs=[
            # batch-tiled obs
            pl.BlockSpec((tB, A * n_obs), lambda i: (i, 0)),
            # full, VMEM-resident fused weights/biases (same block every step)
            pl.BlockSpec((A * n_obs, A * HID), lambda i: (0, 0)),
            pl.BlockSpec((1, A * HID), lambda i: (0, 0)),
            pl.BlockSpec((A * HID, A * HX), lambda i: (0, 0)),
            pl.BlockSpec((1, A * HX), lambda i: (0, 0)),
            pl.BlockSpec((A * HX, A * n_act), lambda i: (0, 0)),
            pl.BlockSpec((1, A * n_act), lambda i: (0, 0)),
        ],
        out_specs=pl.BlockSpec((tB, A * n_act), lambda i: (i, 0)),
        compiler_params=pltpu.CompilerParams(
            dimension_semantics=("parallel",)),   # batch axis -> megacore split
        cost_estimate=pl.CostEstimate(flops=flops, transcendentals=0,
                                      bytes_accessed=bytes_accessed),
    )(obs_flat, w1_bd, b1_cat, w2_bd, b2_cat, wq_bd, bq_cat)

    # Free reshape back to (B, A, n_act); slice away the batch padding.
    q_values = q_flat[:B].reshape(B, A, n_act)

    # recurrent=False: PyTorch returns uninitialized memory for next_hidden;
    # we return zeros of the same shape.
    # TODO(synk): GRUCell path (recurrent=True) not implemented.
    next_hidden = jnp.zeros((B, A, HX), jnp.float32)
    return q_values, next_hidden


def init_params(key, num_agents, n_obs, n_act):
    """Deterministic init mimicking nn.Linear's U(-1/sqrt(fan_in), 1/sqrt(fan_in))."""
    def linear(key, fan_in, fan_out):
        kw, kb = jax.random.split(key)
        bound = 1.0 / jnp.sqrt(fan_in)
        w = jax.random.uniform(kw, (num_agents, fan_in, fan_out), jnp.float32,
                               -bound, bound)
        b = jax.random.uniform(kb, (num_agents, 1, fan_out), jnp.float32,
                               -bound, bound)
        return w, b

    k1, k2, k3 = jax.random.split(key, 3)
    w1, b1 = linear(k1, n_obs, HID)
    w2, b2 = linear(k2, HID, HX)
    wq, bq = linear(k3, HX, n_act)
    return {"w1": w1, "b1": b1, "w2": w2, "b2": b2, "wq": wq, "bq": bq}


if __name__ == "__main__":
    key = jax.random.PRNGKey(0)
    B, A, N_OBS, N_ACT = 2, 3, 16, 8   # batch, num_agents, obs dim, action dim

    k_params, k_obs = jax.random.split(key)
    params = init_params(k_params, A, N_OBS, N_ACT)
    obs = jax.random.normal(k_obs, (B, A, N_OBS), jnp.float32)
    hidden = jnp.zeros((B, A, HX), jnp.float32)     # QNet.init_hidden

    q_values, next_hidden = jax.jit(qnet_forward)(obs, hidden, params)
    jax.block_until_ready((q_values, next_hidden))

    # Shape sanity vs the PyTorch module.
    assert q_values.shape == (B, A, N_ACT)
    assert next_hidden.shape == (B, A, HX)

    # Cross-check against a plain-JAX reference of the same math.
    ref = jnp.stack(
        [
            jnp.maximum(
                jnp.maximum(obs[:, a, :] @ params["w1"][a] + params["b1"][a], 0.0)
                @ params["w2"][a] + params["b2"][a], 0.0)
            @ params["wq"][a] + params["bq"][a]
            for a in range(A)
        ],
        axis=1,
    )
    assert jnp.allclose(q_values, ref, atol=1e-5, rtol=1e-5)

    print("KERNEL_OK")
</pallas_src>

<mosaic_0001>
module attributes {stable_mosaic.version = 11 : i64} {
  func.func @_qnet_kernel(%arg0: i32, %arg1: memref<8x48xf32, #tpu.memory_space<vmem>>, %arg2: memref<48x384xf32, #tpu.memory_space<vmem>>, %arg3: memref<1x384xf32, #tpu.memory_space<vmem>>, %arg4: memref<384x96xf32, #tpu.memory_space<vmem>>, %arg5: memref<1x96xf32, #tpu.memory_space<vmem>>, %arg6: memref<96x24xf32, #tpu.memory_space<vmem>>, %arg7: memref<1x24xf32, #tpu.memory_space<vmem>>, %arg8: memref<8x24xf32, #tpu.memory_space<vmem>>) attributes {dimension_semantics = [#tpu.dimension_semantics<parallel>], iteration_bounds = array<i64: 1>, scalar_prefetch = 0 : i64, scratch_operands = 0 : i64, tpu.core_type = #tpu.core_type<tc>, window_params = [{transform_indices = @transform_0, window_bounds = array<i64: 8, 48>}, {pipeline_mode = #tpu.pipeline_mode<synchronous>, transform_indices = @transform_1, window_bounds = array<i64: 48, 384>}, {pipeline_mode = #tpu.pipeline_mode<synchronous>, transform_indices = @transform_2, window_bounds = array<i64: 1, 384>}, {pipeline_mode = #tpu.pipeline_mode<synchronous>, transform_indices = @transform_3, window_bounds = array<i64: 384, 96>}, {pipeline_mode = #tpu.pipeline_mode<synchronous>, transform_indices = @transform_4, window_bounds = array<i64: 1, 96>}, {pipeline_mode = #tpu.pipeline_mode<synchronous>, transform_indices = @transform_5, window_bounds = array<i64: 96, 24>}, {pipeline_mode = #tpu.pipeline_mode<synchronous>, transform_indices = @transform_6, window_bounds = array<i64: 1, 24>}, {transform_indices = @transform_7, window_bounds = array<i64: 8, 24>}]} {
    %c0 = arith.constant 0 : index
    %c0_0 = arith.constant 0 : index
    %0 = vector.load %arg1[%c0, %c0_0] : memref<8x48xf32, #tpu.memory_space<vmem>>, vector<8x48xf32>
    %c0_1 = arith.constant 0 : index
    %c0_2 = arith.constant 0 : index
    %1 = vector.load %arg2[%c0_1, %c0_2] : memref<48x384xf32, #tpu.memory_space<vmem>>, vector<48x384xf32>
    %cst = arith.constant dense<0.000000e+00> : vector<8x384xf32>
    %2 = tpu.matmul %0, %1, %cst {dimension_numbers = #tpu.dot_dimension_numbers<[1], [0], [0], [1], [0, 0, 1, 1], [], []>} : vector<8x48xf32>, vector<48x384xf32>, vector<8x384xf32> -> vector<8x384xf32>
    %c0_3 = arith.constant 0 : index
    %c0_4 = arith.constant 0 : index
    %3 = vector.load %arg3[%c0_3, %c0_4] : memref<1x384xf32, #tpu.memory_space<vmem>>, vector<1x384xf32>
    %4 = vector.broadcast %3 : vector<1x384xf32> to vector<8x384xf32>
    %5 = arith.addf %2, %4 : vector<8x384xf32>
    %cst_5 = arith.constant 0.000000e+00 : f32
    %6 = vector.broadcast %cst_5 : f32 to vector<8x384xf32>
    %7 = arith.maximumf %5, %6 : vector<8x384xf32>
    %c0_6 = arith.constant 0 : index
    %c0_7 = arith.constant 0 : index
    %8 = vector.load %arg4[%c0_6, %c0_7] : memref<384x96xf32, #tpu.memory_space<vmem>>, vector<384x96xf32>
    %cst_8 = arith.constant dense<0.000000e+00> : vector<8x96xf32>
    %9 = tpu.matmul %7, %8, %cst_8 {dimension_numbers = #tpu.dot_dimension_numbers<[1], [0], [0], [1], [0, 0, 1, 1], [], []>} : vector<8x384xf32>, vector<384x96xf32>, vector<8x96xf32> -> vector<8x96xf32>
    %c0_9 = arith.constant 0 : index
    %c0_10 = arith.constant 0 : index
    %10 = vector.load %arg5[%c0_9, %c0_10] : memref<1x96xf32, #tpu.memory_space<vmem>>, vector<1x96xf32>
    %11 = vector.broadcast %10 : vector<1x96xf32> to vector<8x96xf32>
    %12 = arith.addf %9, %11 : vector<8x96xf32>
    %cst_11 = arith.constant 0.000000e+00 : f32
    %13 = vector.broadcast %cst_11 : f32 to vector<8x96xf32>
    %14 = arith.maximumf %12, %13 : vector<8x96xf32>
    %c0_12 = arith.constant 0 : index
    %c0_13 = arith.constant 0 : index
    %15 = vector.load %arg6[%c0_12, %c0_13] : memref<96x24xf32, #tpu.memory_space<vmem>>, vector<96x24xf32>
    %cst_14 = arith.constant dense<0.000000e+00> : vector<8x24xf32>
    %16 = tpu.matmul %14, %15, %cst_14 {dimension_numbers = #tpu.dot_dimension_numbers<[1], [0], [0], [1], [0, 0, 1, 1], [], []>} : vector<8x96xf32>, vector<96x24xf32>, vector<8x24xf32> -> vector<8x24xf32>
    %c0_15 = arith.constant 0 : index
    %c0_16 = arith.constant 0 : index
    %17 = vector.load %arg7[%c0_15, %c0_16] : memref<1x24xf32, #tpu.memory_space<vmem>>, vector<1x24xf32>
    %18 = vector.broadcast %17 : vector<1x24xf32> to vector<8x24xf32>
    %19 = arith.addf %16, %18 : vector<8x24xf32>
    %c0_17 = arith.constant 0 : index
    %c0_18 = arith.constant 0 : index
    %20 = vector.load %arg8[%c0_17, %c0_18] : memref<8x24xf32, #tpu.memory_space<vmem>>, vector<8x24xf32>
    tpu.vector_store %arg8[%c0_17, %c0_18], %19 {strides = array<i32>} : memref<8x24xf32, #tpu.memory_space<vmem>>, vector<8x24xf32>,
    return
  }
  func.func @transform_0(%arg0: i32) -> (i32, i32) {
    %c0_i32 = arith.constant 0 : i32
    %c0_i32_0 = arith.constant 0 : i32
    return %arg0, %c0_i32 : i32, i32
  }
  func.func @transform_1(%arg0: i32) -> (i32, i32) {
    %c0_i32 = arith.constant 0 : i32
    %c0_i32_0 = arith.constant 0 : i32
    %c0_i32_1 = arith.constant 0 : i32
    return %c0_i32, %c0_i32_0 : i32, i32
  }
  func.func @transform_2(%arg0: i32) -> (i32, i32) {
    %c0_i32 = arith.constant 0 : i32
    %c0_i32_0 = arith.constant 0 : i32
    %c0_i32_1 = arith.constant 0 : i32
    return %c0_i32, %c0_i32_0 : i32, i32
  }
  func.func @transform_3(%arg0: i32) -> (i32, i32) {
    %c0_i32 = arith.constant 0 : i32
    %c0_i32_0 = arith.constant 0 : i32
    %c0_i32_1 = arith.constant 0 : i32
    return %c0_i32, %c0_i32_0 : i32, i32
  }
  func.func @transform_4(%arg0: i32) -> (i32, i32) {
    %c0_i32 = arith.constant 0 : i32
    %c0_i32_0 = arith.constant 0 : i32
    %c0_i32_1 = arith.constant 0 : i32
    return %c0_i32, %c0_i32_0 : i32, i32
  }
  func.func @transform_5(%arg0: i32) -> (i32, i32) {
    %c0_i32 = arith.constant 0 : i32
    %c0_i32_0 = arith.constant 0 : i32
    %c0_i32_1 = arith.constant 0 : i32
    return %c0_i32, %c0_i32_0 : i32, i32
  }
  func.func @transform_6(%arg0: i32) -> (i32, i32) {
    %c0_i32 = arith.constant 0 : i32
    %c0_i32_0 = arith.constant 0 : i32
    %c0_i32_1 = arith.constant 0 : i32
    return %c0_i32, %c0_i32_0 : i32, i32
  }
  func.func @transform_7(%arg0: i32) -> (i32, i32) {
    %c0_i32 = arith.constant 0 : i32
    %c0_i32_0 = arith.constant 0 : i32
    return %arg0, %c0_i32 : i32, i32
  }
}

</mosaic_0001>

<llo_original>
// kernel: qnet_forward.1
$region0: #{qnet_forward.1}
  #allocation0 [shape = 'u32[]', space=smem, size = 0x4, offset = 0x4, fixed_abs, tag = 'smem constant byte address 0x4 - core index']
  #allocation1 [shape = 'u32[144,128]{1,0:T(1,128)}', space=vmem, size = 0x12000, scoped, tag = 'internal scratch']
  %s0 = inlined_call_operand.vmem [shape: f32[8,48], index: 0, kind: input, shape index: {}]
  %s1 = inlined_call_operand.vmem [shape: f32[48,384], index: 1, kind: input, shape index: {}]
  %s2 = inlined_call_operand.vmem [shape: f32[1,384], index: 2, kind: input, shape index: {}]
  %s3 = inlined_call_operand.vmem [shape: f32[384,96], index: 3, kind: input, shape index: {}]
  %s4 = inlined_call_operand.vmem [shape: f32[1,96], index: 4, kind: input, shape index: {}]
  %s5 = inlined_call_operand.vmem [shape: f32[96,24], index: 5, kind: input, shape index: {}]
  %s6 = inlined_call_operand.vmem [shape: f32[1,24], index: 6, kind: input, shape index: {}]
  %s7 = inlined_call_operand.vmem [shape: f32[8,24], index: 7, kind: output, shape index: {}]
  %s8 = sld [smem:[#allocation0]]
  $region38: #{qnet_forward.1} parent=0
    _
  %s10 = ssub.s32 1, %s8
  %s11 = scalar_select 0, %s10, %s8
  // Predicated region
  $region2: #{qnet_forward.1} parent=0 // pred_check
    _
  $region3: #{qnet_forward.1} parent=0 // pred_check_branch
    %13 = sbr.rel (0) target = $region5
  $region4: #{qnet_forward.1} parent=0 // pred_region
    _
  $region5: #{qnet_forward.1} parent=0 // pred_fallthru
    _
  // Predicated region
  $region6: #{qnet_forward.1} parent=0 // pred_check
    _
  $region7: #{qnet_forward.1} parent=0 // pred_check_branch
    %15 = sbr.rel (0) target = $region9
  $region8: #{qnet_forward.1} parent=0 // pred_region
    _
  $region9: #{qnet_forward.1} parent=0 // pred_fallthru
    _
  // Predicated region
  $region10: #{qnet_forward.1} parent=0 // pred_check
    _
  $region11: #{qnet_forward.1} parent=0 // pred_check_branch
    %17 = sbr.rel (0) target = $region13
  $region12: #{qnet_forward.1} parent=0 // pred_region
    _
  $region13: #{qnet_forward.1} parent=0 // pred_fallthru
    _
  // Predicated region
  $region14: #{qnet_forward.1} parent=0 // pred_check
    _
  $region15: #{qnet_forward.1} parent=0 // pred_check_branch
    %19 = sbr.rel (0) target = $region17
  $region16: #{qnet_forward.1} parent=0 // pred_region
    _
  $region17: #{qnet_forward.1} parent=0 // pred_fallthru
    _
  // Predicated region
  $region18: #{qnet_forward.1} parent=0 // pred_check
    _
  $region19: #{qnet_forward.1} parent=0 // pred_check_branch
    %21 = sbr.rel (0) target = $region21
  $region20: #{qnet_forward.1} parent=0 // pred_region
    _
  $region21: #{qnet_forward.1} parent=0 // pred_fallthru
    _
  // Predicated region
  $region22: #{qnet_forward.1} parent=0 // pred_check
    _
  $region23: #{qnet_forward.1} parent=0 // pred_check_branch
    %23 = sbr.rel (0) target = $region25
  $region24: #{qnet_forward.1} parent=0 // pred_region
    _
  $region25: #{qnet_forward.1} parent=0 // pred_fallthru
    _
  // Predicated region
  $region26: #{qnet_forward.1} parent=0 // pred_check
    _
  $region27: #{qnet_forward.1} parent=0 // pred_check_branch
    %25 = sbr.rel (0) target = $region29
  $region28: #{qnet_forward.1} parent=0 // pred_region
    _
  $region29: #{qnet_forward.1} parent=0 // pred_fallthru
    _
  %v26 = vld [vmem:[%s0] sm:$0xff]
  %v27 = vld [vmem:[%s1] sm:$0xff]
  %v28 = vld [vmem:[%s1 + $0x8] sm:$0xff]
  %v29 = vld [vmem:[%s1 + $0x10] sm:$0xff]
  %v30 = vld [vmem:[%s1 + $0x18] sm:$0xff]
  %v31 = vld [vmem:[%s1 + $0x20] sm:$0xff]
  %v32 = vld [vmem:[%s1 + $0x28] sm:$0xff]
  %v33 = vld [vmem:[%s1 + $0x30] sm:$0xff]
  %v34 = vld [vmem:[%s1 + $0x38] sm:$0xff]
  %v35 = vld [vmem:[%s1 + $0x40] sm:$0xff]
  %v36 = vld [vmem:[%s1 + $0x48] sm:$0xff]
  %v37 = vld [vmem:[%s1 + $0x50] sm:$0xff]
  %v38 = vld [vmem:[%s1 + $0x58] sm:$0xff]
  %v39 = vld [vmem:[%s1 + $0x60] sm:$0xff]
  %v40 = vld [vmem:[%s1 + $0x68] sm:$0xff]
  %v41 = vld [vmem:[%s1 + $0x70] sm:$0xff]
  %v42 = vld [vmem:[%s1 + $0x78] sm:$0xff]
  %v43 = vld [vmem:[%s1 + $0x80] sm:$0xff]
  %v44 = vld [vmem:[%s1 + $0x88] sm:$0xff]
  %v45 = vld [vmem:[%s2] sm:$0x7]
  %v47 = vlaneseq
  %v48 = vshrl.u32 %v47, 7
  %v49 = vsub.s32 0, %v48
  %v50 = vrot.slane %v45, %v49
  %v51 = vlaneseq
  %v52 = vshrl.u32 %v51, 7
  %v53 = vsub.s32 1, %v52
  %v54 = vrot.slane %v45, %v53
  %v55 = vlaneseq
  %v56 = vshrl.u32 %v55, 7
  %v57 = vsub.s32 2, %v56
  %v58 = vrot.slane %v45, %v57
  %vm62 = vcmask 392192
  %v64 = vsel %vm62, %v26, 0
  %66 = vmatprep.subr.mxu0 0.0
  %67 = vmatpush1.msra.mxu0 0.0
  %68 = vmatprep.subr.mxu0 0.0
  %69 = vmatpush1.msra.mxu0 0.0
  %70 = vmatprep.subr.mxu0 0.0
  %71 = vmatpush1.msra.mxu0 0.0
  %72 = vmatprep.subr.mxu0 0.0
  %73 = vmatpush1.msra.mxu0 0.0
  %74 = vmatprep.subr.mxu0 0.0
  %75 = vmatpush1.msra.mxu0 0.0
  %76 = vmatprep.subr.mxu0 0.0
  %77 = vmatpush1.msra.mxu0 0.0
  %78 = vmatprep.subr.mxu0 0.0
  %79 = vmatpush1.msra.mxu0 0.0
  %80 = vmatprep.subr.mxu0 0.0
  %81 = vmatpush1.msra.mxu0 0.0
  %82 = vmatprep.subr.mxu0 0.0
  %83 = vmatpush1.msra.mxu0 0.0
  %84 = vmatprep.subr.mxu0 0.0
  %85 = vmatpush1.msra.mxu0 0.0
  %86 = vmatprep.subr.mxu0 %v43
  %87 = vmatpush1.msra.mxu0 %v42
  %88 = vmatprep.subr.mxu0 %v40
  %89 = vmatpush1.msra.mxu0 %v39
  %90 = vmatprep.subr.mxu0 %v37
  %91 = vmatpush1.msra.mxu0 %v36
  %92 = vmatprep.subr.mxu0 %v34
  %93 = vmatpush1.msra.mxu0 %v33
  %94 = vmatprep.subr.mxu0 %v31
  %95 = vmatpush1.msra.mxu0 %v30
  %96 = vmatprep.subr.mxu0 %v28
  %97 = vmatpush1.msra.mxu0 %v27
  %98 = vmatprep.subr.mxu0 0.0
  %99 = vmatpush2.msra.mxu0 0.0
  %100 = vmatprep.subr.mxu0 0.0
  %101 = vmatpush2.msra.mxu0 0.0
  %102 = vmatprep.subr.mxu0 0.0
  %103 = vmatpush2.msra.mxu0 0.0
  %104 = vmatprep.subr.mxu0 0.0
  %105 = vmatpush2.msra.mxu0 0.0
  %106 = vmatprep.subr.mxu0 0.0
  %107 = vmatpush2.msra.mxu0 0.0
  %108 = vmatprep.subr.mxu0 0.0
  %109 = vmatpush2.msra.mxu0 0.0
  %110 = vmatprep.subr.mxu0 0.0
  %111 = vmatpush2.msra.mxu0 0.0
  %112 = vmatprep.subr.mxu0 0.0
  %113 = vmatpush2.msra.mxu0 0.0
  %114 = vmatprep.subr.mxu0 0.0
  %115 = vmatpush2.msra.mxu0 0.0
  %116 = vmatprep.subr.mxu0 0.0
  %117 = vmatpush2.msra.mxu0 0.0
  %118 = vmatprep.subr.mxu0 0.0
  %119 = vmatpush2.msra.mxu0 0.0
  %120 = vmatprep.subr.mxu0 0.0
  %121 = vmatpush2.msra.mxu0 0.0
  %122 = vmatprep.subr.mxu0 0.0
  %123 = vmatpush2.msra.mxu0 0.0
  %124 = vmatprep.subr.mxu0 0.0
  %125 = vmatpush2.msra.mxu0 0.0
  %126 = vmatprep.subr.mxu0 0.0
  %127 = vmatpush2.msra.mxu0 0.0
  %128 = vmatprep.subr.mxu0 0.0
  %129 = vmatpush2.msra.mxu0 0.0
  %130 = vmatprep.mubr.f32.mxu0 0.0
  %131 = vmatmul.mubr.f32.gmra.mxu0 %v64
  %v132 = vpop.f32.mrf.mxu0
  %v133 = vadd.f32 %v50, %v132
  %v134 = vpop.f32.mrf.mxu0
  %v135 = vadd.f32 %v54, %v134
  %136 = vdwg.mxu0
  %137 = vmatprep.subr.mxu0 0.0
  %138 = vmatpush1.msra.mxu0 0.0
  %139 = vmatprep.subr.mxu0 0.0
  %140 = vmatpush1.msra.mxu0 0.0
  %141 = vmatprep.subr.mxu0 0.0
  %142 = vmatpush1.msra.mxu0 0.0
  %143 = vmatprep.subr.mxu0 0.0
  %144 = vmatpush1.msra.mxu0 0.0
  %145 = vmatprep.subr.mxu0 0.0
  %146 = vmatpush1.msra.mxu0 0.0
  %147 = vmatprep.subr.mxu0 0.0
  %148 = vmatpush1.msra.mxu0 0.0
  %149 = vmatprep.subr.mxu0 0.0
  %150 = vmatpush1.msra.mxu0 0.0
  %151 = vmatprep.subr.mxu0 0.0
  %152 = vmatpush1.msra.mxu0 0.0
  %153 = vmatprep.subr.mxu0 0.0
  %154 = vmatpush1.msra.mxu0 0.0
  %155 = vmatprep.subr.mxu0 0.0
  %156 = vmatpush1.msra.mxu0 0.0
  %157 = vmatprep.subr.mxu0 0.0
  %158 = vmatpush1.msra.mxu0 %v44
  %159 = vmatprep.subr.mxu0 0.0
  %160 = vmatpush1.msra.mxu0 %v41
  %161 = vmatprep.subr.mxu0 0.0
  %162 = vmatpush1.msra.mxu0 %v38
  %163 = vmatprep.subr.mxu0 0.0
  %164 = vmatpush1.msra.mxu0 %v35
  %165 = vmatprep.subr.mxu0 0.0
  %166 = vmatpush1.msra.mxu0 %v32
  %167 = vmatprep.subr.mxu0 0.0
  %168 = vmatpush1.msra.mxu0 %v29
  %169 = vmatprep.subr.mxu0 0.0
  %170 = vmatpush2.msra.mxu0 0.0
  %171 = vmatprep.subr.mxu0 0.0
  %172 = vmatpush2.msra.mxu0 0.0
  %173 = vmatprep.subr.mxu0 0.0
  %174 = vmatpush2.msra.mxu0 0.0
  %175 = vmatprep.subr.mxu0 0.0
  %176 = vmatpush2.msra.mxu0 0.0
  %177 = vmatprep.subr.mxu0 0.0
  %178 = vmatpush2.msra.mxu0 0.0
  %179 = vmatprep.subr.mxu0 0.0
  %180 = vmatpush2.msra.mxu0 0.0
  %181 = vmatprep.subr.mxu0 0.0
  %182 = vmatpush2.msra.mxu0 0.0
  %183 = vmatprep.subr.mxu0 0.0
  %184 = vmatpush2.msra.mxu0 0.0
  %185 = vmatprep.subr.mxu0 0.0
  %186 = vmatpush2.msra.mxu0 0.0
  %187 = vmatprep.subr.mxu0 0.0
  %188 = vmatpush2.msra.mxu0 0.0
  %189 = vmatprep.subr.mxu0 0.0
  %190 = vmatpush2.msra.mxu0 0.0
  %191 = vmatprep.subr.mxu0 0.0
  %192 = vmatpush2.msra.mxu0 0.0
  %193 = vmatprep.subr.mxu0 0.0
  %194 = vmatpush2.msra.mxu0 0.0
  %195 = vmatprep.subr.mxu0 0.0
  %196 = vmatpush2.msra.mxu0 0.0
  %197 = vmatprep.subr.mxu0 0.0
  %198 = vmatpush2.msra.mxu0 0.0
  %199 = vmatprep.subr.mxu0 0.0
  %200 = vmatpush2.msra.mxu0 0.0
  %201 = vmatprep.mubr.f32.mxu0 0.0
  %202 = vmatmul.mubr.f32.gmra.mxu0 %v64
  %v203 = vpop.f32.mrf.mxu0
  %v204 = vadd.f32 %v58, %v203
  %v205 = vpop.f32.mrf.mxu0
  %206 = vdwg.mxu0
  %v207 = vmax.f32 %v133, 0.0
  %v208 = vmax.f32 %v135, 0.0
  %v209 = vmax.f32 %v204, 0.0
  %v210 = vld [vmem:[%s3] sm:$0xff]
  %v211 = vld [vmem:[%s3 + $0x8] sm:$0xff]
  %v212 = vld [vmem:[%s3 + $0x10] sm:$0xff]
  %v213 = vld [vmem:[%s3 + $0x18] sm:$0xff]
  %v214 = vld [vmem:[%s3 + $0x20] sm:$0xff]
  %v215 = vld [vmem:[%s3 + $0x28] sm:$0xff]
  %v216 = vld [vmem:[%s3 + $0x30] sm:$0xff]
  %v217 = vld [vmem:[%s3 + $0x38] sm:$0xff]
  %v218 = vld [vmem:[%s3 + $0x40] sm:$0xff]
  %v219 = vld [vmem:[%s3 + $0x48] sm:$0xff]
  %v220 = vld [vmem:[%s3 + $0x50] sm:$0xff]
  %v221 = vld [vmem:[%s3 + $0x58] sm:$0xff]
  %v222 = vld [vmem:[%s3 + $0x60] sm:$0xff]
  %v223 = vld [vmem:[%s3 + $0x68] sm:$0xff]
  %v224 = vld [vmem:[%s3 + $0x70] sm:$0xff]
  %v225 = vld [vmem:[%s3 + $0x78] sm:$0xff]
  %v226 = vld [vmem:[%s3 + $0x80] sm:$0xff]
  %v227 = vld [vmem:[%s3 + $0x88] sm:$0xff]
  %v228 = vld [vmem:[%s3 + $0x90] sm:$0xff]
  %v229 = vld [vmem:[%s3 + $0x98] sm:$0xff]
  %v230 = vld [vmem:[%s3 + $0xa0] sm:$0xff]
  %v231 = vld [vmem:[%s3 + $0xa8] sm:$0xff]
  %v232 = vld [vmem:[%s3 + $0xb0] sm:$0xff]
  %v233 = vld [vmem:[%s3 + $0xb8] sm:$0xff]
  %v234 = vld [vmem:[%s3 + $0xc0] sm:$0xff]
  %v235 = vld [vmem:[%s3 + $0xc8] sm:$0xff]
  %v236 = vld [vmem:[%s3 + $0xd0] sm:$0xff]
  %v237 = vld [vmem:[%s3 + $0xd8] sm:$0xff]
  %v238 = vld [vmem:[%s3 + $0xe0] sm:$0xff]
  %v239 = vld [vmem:[%s3 + $0xe8] sm:$0xff]
  %v240 = vld [vmem:[%s3 + $0xf0] sm:$0xff]
  %v241 = vld [vmem:[%s3 + $0xf8] sm:$0xff]
  %v242 = vld [vmem:[%s3 + $0x100] sm:$0xff]
  %v243 = vld [vmem:[%s3 + $0x108] sm:$0xff]
  %v244 = vld [vmem:[%s3 + $0x110] sm:$0xff]
  %v245 = vld [vmem:[%s3 + $0x118] sm:$0xff]
  %v246 = vld [vmem:[%s3 + $0x120] sm:$0xff]
  %v247 = vld [vmem:[%s3 + $0x128] sm:$0xff]
  %v248 = vld [vmem:[%s3 + $0x130] sm:$0xff]
  %v249 = vld [vmem:[%s3 + $0x138] sm:$0xff]
  %v250 = vld [vmem:[%s3 + $0x140] sm:$0xff]
  %v251 = vld [vmem:[%s3 + $0x148] sm:$0xff]
  %v252 = vld [vmem:[%s3 + $0x150] sm:$0xff]
  %v253 = vld [vmem:[%s3 + $0x158] sm:$0xff]
  %v254 = vld [vmem:[%s3 + $0x160] sm:$0xff]
  %v255 = vld [vmem:[%s3 + $0x168] sm:$0xff]
  %v256 = vld [vmem:[%s3 + $0x170] sm:$0xff]
  %v257 = vld [vmem:[%s3 + $0x178] sm:$0xff]
  %v258 = vld [vmem:[%s4] sm:$0x1]
  %v260 = vlaneseq
  %v261 = vshrl.u32 %v260, 7
  %v262 = vsub.s32 0, %v261
  %v263 = vrot.slane %v258, %v262
  %265 = vmatprep.subr.mxu0 0.0
  %266 = vmatpush1.msra.mxu0 %v225
  %267 = vmatprep.subr.mxu0 0.0
  %268 = vmatpush1.msra.mxu0 %v224
  %269 = vmatprep.subr.mxu0 0.0
  %270 = vmatpush1.msra.mxu0 %v223
  %271 = vmatprep.subr.mxu0 0.0
  %272 = vmatpush1.msra.mxu0 %v222
  %273 = vmatprep.subr.mxu0 0.0
  %274 = vmatpush1.msra.mxu0 %v221
  %275 = vmatprep.subr.mxu0 0.0
  %276 = vmatpush1.msra.mxu0 %v220
  %277 = vmatprep.subr.mxu0 0.0
  %278 = vmatpush1.msra.mxu0 %v219
  %279 = vmatprep.subr.mxu0 0.0
  %280 = vmatpush1.msra.mxu0 %v218
  %281 = vmatprep.subr.mxu0 0.0
  %282 = vmatpush1.msra.mxu0 %v217
  %283 = vmatprep.subr.mxu0 0.0
  %284 = vmatpush1.msra.mxu0 %v216
  %285 = vmatprep.subr.mxu0 0.0
  %286 = vmatpush1.msra.mxu0 %v215
  %287 = vmatprep.subr.mxu0 0.0
  %288 = vmatpush1.msra.mxu0 %v214
  %289 = vmatprep.subr.mxu0 0.0
  %290 = vmatpush1.msra.mxu0 %v213
  %291 = vmatprep.subr.mxu0 0.0
  %292 = vmatpush1.msra.mxu0 %v212
  %293 = vmatprep.subr.mxu0 0.0
  %294 = vmatpush1.msra.mxu0 %v211
  %295 = vmatprep.subr.mxu0 0.0
  %296 = vmatpush1.msra.mxu0 %v210
  %297 = vmatprep.subr.mxu0 0.0
  %298 = vmatpush2.msra.mxu0 %v241
  %299 = vmatprep.subr.mxu0 0.0
  %300 = vmatpush2.msra.mxu0 %v240
  %301 = vmatprep.subr.mxu0 0.0
  %302 = vmatpush2.msra.mxu0 %v239
  %303 = vmatprep.subr.mxu0 0.0
  %304 = vmatpush2.msra.mxu0 %v238
  %305 = vmatprep.subr.mxu0 0.0
  %306 = vmatpush2.msra.mxu0 %v237
  %307 = vmatprep.subr.mxu0 0.0
  %308 = vmatpush2.msra.mxu0 %v236
  %309 = vmatprep.subr.mxu0 0.0
  %310 = vmatpush2.msra.mxu0 %v235
  %311 = vmatprep.subr.mxu0 0.0
  %312 = vmatpush2.msra.mxu0 %v234
  %313 = vmatprep.subr.mxu0 0.0
  %314 = vmatpush2.msra.mxu0 %v233
  %315 = vmatprep.subr.mxu0 0.0
  %316 = vmatpush2.msra.mxu0 %v232
  %317 = vmatprep.subr.mxu0 0.0
  %318 = vmatpush2.msra.mxu0 %v231
  %319 = vmatprep.subr.mxu0 0.0
  %320 = vmatpush2.msra.mxu0 %v230
  %321 = vmatprep.subr.mxu0 0.0
  %322 = vmatpush2.msra.mxu0 %v229
  %323 = vmatprep.subr.mxu0 0.0
  %324 = vmatpush2.msra.mxu0 %v228
  %325 = vmatprep.subr.mxu0 0.0
  %326 = vmatpush2.msra.mxu0 %v227
  %327 = vmatprep.subr.mxu0 0.0
  %328 = vmatpush2.msra.mxu0 %v226
  %329 = vmatprep.mubr.f32.mxu0 %v208
  %330 = vmatmul.mubr.f32.gmra.mxu0 %v207
  %v331 = vpop.f32.mrf.mxu0
  %v332 = vadd.f32 %v263, %v331
  %v333 = vpop.f32.mrf.mxu0
  %334 = vdwg.mxu0
  %335 = vmatprep.subr.mxu0 0.0
  %336 = vmatpush1.msra.mxu0 %v257
  %337 = vmatprep.subr.mxu0 0.0
  %338 = vmatpush1.msra.mxu0 %v256
  %339 = vmatprep.subr.mxu0 0.0
  %340 = vmatpush1.msra.mxu0 %v255
  %341 = vmatprep.subr.mxu0 0.0
  %342 = vmatpush1.msra.mxu0 %v254
  %343 = vmatprep.subr.mxu0 0.0
  %344 = vmatpush1.msra.mxu0 %v253
  %345 = vmatprep.subr.mxu0 0.0
  %346 = vmatpush1.msra.mxu0 %v252
  %347 = vmatprep.subr.mxu0 0.0
  %348 = vmatpush1.msra.mxu0 %v251
  %349 = vmatprep.subr.mxu0 0.0
  %350 = vmatpush1.msra.mxu0 %v250
  %351 = vmatprep.subr.mxu0 0.0
  %352 = vmatpush1.msra.mxu0 %v249
  %353 = vmatprep.subr.mxu0 0.0
  %354 = vmatpush1.msra.mxu0 %v248
  %355 = vmatprep.subr.mxu0 0.0
  %356 = vmatpush1.msra.mxu0 %v247
  %357 = vmatprep.subr.mxu0 0.0
  %358 = vmatpush1.msra.mxu0 %v246
  %359 = vmatprep.subr.mxu0 0.0
  %360 = vmatpush1.msra.mxu0 %v245
  %361 = vmatprep.subr.mxu0 0.0
  %362 = vmatpush1.msra.mxu0 %v244
  %363 = vmatprep.subr.mxu0 0.0
  %364 = vmatpush1.msra.mxu0 %v243
  %365 = vmatprep.subr.mxu0 0.0
  %366 = vmatpush1.msra.mxu0 %v242
  %367 = vmatprep.subr.mxu0 0.0
  %368 = vmatpush2.msra.mxu0 0.0
  %369 = vmatprep.subr.mxu0 0.0
  %370 = vmatpush2.msra.mxu0 0.0
  %371 = vmatprep.subr.mxu0 0.0
  %372 = vmatpush2.msra.mxu0 0.0
  %373 = vmatprep.subr.mxu0 0.0
  %374 = vmatpush2.msra.mxu0 0.0
  %375 = vmatprep.subr.mxu0 0.0
  %376 = vmatpush2.msra.mxu0 0.0
  %377 = vmatprep.subr.mxu0 0.0
  %378 = vmatpush2.msra.mxu0 0.0
  %379 = vmatprep.subr.mxu0 0.0
  %380 = vmatpush2.msra.mxu0 0.0
  %381 = vmatprep.subr.mxu0 0.0
  %382 = vmatpush2.msra.mxu0 0.0
  %383 = vmatprep.subr.mxu0 0.0
  %384 = vmatpush2.msra.mxu0 0.0
  %385 = vmatprep.subr.mxu0 0.0
  %386 = vmatpush2.msra.mxu0 0.0
  %387 = vmatprep.subr.mxu0 0.0
  %388 = vmatpush2.msra.mxu0 0.0
  %389 = vmatprep.subr.mxu0 0.0
  %390 = vmatpush2.msra.mxu0 0.0
  %391 = vmatprep.subr.mxu0 0.0
  %392 = vmatpush2.msra.mxu0 0.0
  %393 = vmatprep.subr.mxu0 0.0
  %394 = vmatpush2.msra.mxu0 0.0
  %395 = vmatprep.subr.mxu0 0.0
  %396 = vmatpush2.msra.mxu0 0.0
  %397 = vmatprep.subr.mxu0 0.0
  %398 = vmatpush2.msra.mxu0 0.0
  %399 = vmatprep.mubr.f32.mxu0 0.0
  %400 = vmatmul.mubr.f32.gmra.mxu0 %v209
  %v401 = vpop.f32.mrf.mxu0
  %v402 = vadd.f32 %v332, %v401
  %v403 = vpop.f32.mrf.mxu0
  %404 = vdwg.mxu0
  %v405 = vmax.f32 %v402, 0.0
  %v406 = vld [vmem:[%s5] sm:$0xff]
  %v407 = vld [vmem:[%s5 + $0x8] sm:$0xff]
  %v408 = vld [vmem:[%s5 + $0x10] sm:$0xff]
  %v409 = vld [vmem:[%s5 + $0x18] sm:$0xff]
  %v410 = vld [vmem:[%s5 + $0x20] sm:$0xff]
  %v411 = vld [vmem:[%s5 + $0x28] sm:$0xff]
  %v412 = vld [vmem:[%s5 + $0x30] sm:$0xff]
  %v413 = vld [vmem:[%s5 + $0x38] sm:$0xff]
  %v414 = vld [vmem:[%s5 + $0x40] sm:$0xff]
  %v415 = vld [vmem:[%s5 + $0x48] sm:$0xff]
  %v416 = vld [vmem:[%s5 + $0x50] sm:$0xff]
  %v417 = vld [vmem:[%s5 + $0x58] sm:$0xff]
  %v418 = vld [vmem:[%s6] sm:$0x1]
  %v420 = vlaneseq
  %v421 = vshrl.u32 %v420, 7
  %v422 = vsub.s32 0, %v421
  %v423 = vrot.slane %v418, %v422
  %vm425 = vcmask 785408
  %v427 = vsel %vm425, %v405, 0
  %429 = vmatprep.subr.mxu0 0.0
  %430 = vmatpush1.msra.mxu0 0.0
  %431 = vmatprep.subr.mxu0 0.0
  %432 = vmatpush1.msra.mxu0 0.0
  %433 = vmatprep.subr.mxu0 0.0
  %434 = vmatpush1.msra.mxu0 0.0
  %435 = vmatprep.subr.mxu0 0.0
  %436 = vmatpush1.msra.mxu0 0.0
  %437 = vmatprep.subr.mxu0 0.0
  %438 = vmatpush1.msra.mxu0 %v417
  %439 = vmatprep.subr.mxu0 0.0
  %440 = vmatpush1.msra.mxu0 %v416
  %441 = vmatprep.subr.mxu0 0.0
  %442 = vmatpush1.msra.mxu0 %v415
  %443 = vmatprep.subr.mxu0 0.0
  %444 = vmatpush1.msra.mxu0 %v414
  %445 = vmatprep.subr.mxu0 0.0
  %446 = vmatpush1.msra.mxu0 %v413
  %447 = vmatprep.subr.mxu0 0.0
  %448 = vmatpush1.msra.mxu0 %v412
  %449 = vmatprep.subr.mxu0 0.0
  %450 = vmatpush1.msra.mxu0 %v411
  %451 = vmatprep.subr.mxu0 0.0
  %452 = vmatpush1.msra.mxu0 %v410
  %453 = vmatprep.subr.mxu0 0.0
  %454 = vmatpush1.msra.mxu0 %v409
  %455 = vmatprep.subr.mxu0 0.0
  %456 = vmatpush1.msra.mxu0 %v408
  %457 = vmatprep.subr.mxu0 0.0
  %458 = vmatpush1.msra.mxu0 %v407
  %459 = vmatprep.subr.mxu0 0.0
  %460 = vmatpush1.msra.mxu0 %v406
  %461 = vmatprep.subr.mxu0 0.0
  %462 = vmatpush2.msra.mxu0 0.0
  %463 = vmatprep.subr.mxu0 0.0
  %464 = vmatpush2.msra.mxu0 0.0
  %465 = vmatprep.subr.mxu0 0.0
  %466 = vmatpush2.msra.mxu0 0.0
  %467 = vmatprep.subr.mxu0 0.0
  %468 = vmatpush2.msra.mxu0 0.0
  %469 = vmatprep.subr.mxu0 0.0
  %470 = vmatpush2.msra.mxu0 0.0
  %471 = vmatprep.subr.mxu0 0.0
  %472 = vmatpush2.msra.mxu0 0.0
  %473 = vmatprep.subr.mxu0 0.0
  %474 = vmatpush2.msra.mxu0 0.0
  %475 = vmatprep.subr.mxu0 0.0
  %476 = vmatpush2.msra.mxu0 0.0
  %477 = vmatprep.subr.mxu0 0.0
  %478 = vmatpush2.msra.mxu0 0.0
  %479 = vmatprep.subr.mxu0 0.0
  %480 = vmatpush2.msra.mxu0 0.0
  %481 = vmatprep.subr.mxu0 0.0
  %482 = vmatpush2.msra.mxu0 0.0
  %483 = vmatprep.subr.mxu0 0.0
  %484 = vmatpush2.msra.mxu0 0.0
  %485 = vmatprep.subr.mxu0 0.0
  %486 = vmatpush2.msra.mxu0 0.0
  %487 = vmatprep.subr.mxu0 0.0
  %488 = vmatpush2.msra.mxu0 0.0
  %489 = vmatprep.subr.mxu0 0.0
  %490 = vmatpush2.msra.mxu0 0.0
  %491 = vmatprep.subr.mxu0 0.0
  %492 = vmatpush2.msra.mxu0 0.0
  %493 = vmatprep.mubr.f32.mxu0 0.0
  %494 = vmatmul.mubr.f32.gmra.mxu0 %v427
  %v495 = vpop.f32.mrf.mxu0
  %v496 = vadd.f32 %v423, %v495
  %v497 = vpop.f32.mrf.mxu0
  %498 = vdwg.mxu0
  %vm499 = vcmask 195584
  %500 = vst.msk [vmem:[%s7] sm:$0xff] %vm499, %v496
  // Predicated region
  $region30: #{qnet_forward.1} parent=0 // pred_check
    _
  $region31: #{qnet_forward.1} parent=0 // pred_check_branch
    %502 = sbr.rel (0) target = $region33
  $region32: #{qnet_forward.1} parent=0 // pred_region
    _
  $region33: #{qnet_forward.1} parent=0 // pred_fallthru
    _
  // Predicated region
  $region34: #{qnet_forward.1} parent=0 // pred_check
    _
  $region35: #{qnet_forward.1} parent=0 // pred_check_branch
    %504 = sbr.rel (0) target = $region37
  $region36: #{qnet_forward.1} parent=0 // pred_region
    _
  $region37: #{qnet_forward.1} parent=0 // pred_fallthru
    _

</llo_original>
